<compile_context>
chip_gen: v6e
topology: v6e:2x2x1
jax: 0.10.0
libtpu: 0.0.40
codegen_flags: <defaults>
</compile_context>

<pallas_src>
import jax
import jax.numpy as jnp
from jax.experimental import pallas as pl
from jax.experimental.pallas import tpu as pltpu


N_MEL_CHANNELS = 80  # Config.N_MEL_CHANNELS (HiFi-GAN convention)


def _conv1x1_kernel(mel_ref, w_ref, b_ref, out_ref):
    # mel_ref: (Bb, C, tT) VMEM tile (input dtype, possibly bf16)
    # w_ref:   (1, C, 1)   VMEM f32 weight (constant index_map -> resident)
    # b_ref:   (1,)        SMEM f32 scalar bias
    # out_ref: (Bb, tT)    VMEM output tile
    C = mel_ref.shape[1]
    w = w_ref[...]  # (1, C, 1) f32, loaded once per step

    # Channel chunk = one sublane-packed slab of the input dtype (8 rows for
    # f32, 16 for bf16) so slices stay tile-aligned and the full (Bb, C, tT)
    # f32 product is never materialized.
    itemsize = jnp.dtype(mel_ref.dtype).itemsize
    chunk = 8 * max(1, 4 // itemsize)

    acc = jnp.zeros(out_ref.shape, jnp.float32)  # (Bb, tT) f32 accumulator
    for c0 in range(0, C, chunk):
        c1 = min(c0 + chunk, C)
        mel_c = mel_ref[:, c0:c1, :].astype(jnp.float32)       # (Bb, ck, tT)
        acc = acc + jnp.sum(mel_c * w[:, c0:c1, :], axis=1)    # VPU mul + sublane reduce

    # Single fused full-tile write: one VPU add + one lane-dense store.
    out_ref[...] = (acc + b_ref[0]).astype(out_ref.dtype)


def hifi_dummy_forward(mel, weight, bias, *, target_tile_mib=5, b_block=8,
                       out_dtype=None):
    """mel: (B, C, T); weight: (C,); bias: () -> (B, T) == conv1x1(mel).squeeze(1)."""
    B, C, T = mel.shape
    out_dtype = mel.dtype if out_dtype is None else out_dtype
    itemsize = jnp.dtype(mel.dtype).itemsize
    out_itemsize = jnp.dtype(out_dtype).itemsize

    # ---- batch tile: multiple of 8 sublanes when the batch allows it --------
    if B >= 8:
        Bb = max(8, (int(b_block) // 8) * 8)
        Bb = min(Bb, (B // 8) * 8)  # never exceed what B can fill in full-8 blocks
    else:
        Bb = B
    grid_b = pl.cdiv(B, Bb)

    # ---- adaptive time tile: ~target_tile_mib MiB of mel traffic per tile ---
    target_bytes = int(target_tile_mib) << 20
    tT = max(128, (target_bytes // (Bb * C * itemsize) // 128) * 128)
    if T % 128 == 0:
        tT = min(tT, T)
    elif T <= tT:
        tT = T  # single full-T block (legal: equals the full dim)
    # else: tT stays a multiple of 128; the last (partial) block is masked.

    # ---- megacore: keep >= 2 programs on the leading (time) parallel axis ---
    # For B=1 (typical vocoder inference) the batch axis has a single program;
    # split T so v7x's second TensorCore isn't left idle.
    if grid_b == 1 and pl.cdiv(T, tT) < 2 and T >= 256:
        half = -(-T // 2)                      # ceil(T / 2)
        tT = max(128, -(-half // 128) * 128)   # round up to a multiple of 128

    grid_t = pl.cdiv(T, tT)
    grid = (grid_t, grid_b)  # time axis FIRST (long axis leads for megacore)

    # ---- VMEM budget: double-buffered mel + out tiles, resident weight ------
    mel_tile_bytes = Bb * C * tT * itemsize
    out_tile_bytes = Bb * tT * out_itemsize
    vmem_need = 2 * (mel_tile_bytes + out_tile_bytes) + C * 4 + (1 << 20)
    vmem_limit = int(min(max(vmem_need, 16 << 20), 32 << 20))  # safe on v5e/v6e/v7x

    w3d = weight.reshape(1, C, 1).astype(jnp.float32)
    b1d = bias.reshape(1).astype(jnp.float32)

    return pl.pallas_call(
        _conv1x1_kernel,
        out_shape=jax.ShapeDtypeStruct((B, T), out_dtype),
        grid_spec=pltpu.PrefetchScalarGridSpec(
            num_scalar_prefetch=0,
            grid=grid,
            in_specs=[
                # mel tile for (time block ti, batch block bi)
                pl.BlockSpec((Bb, C, tT), lambda ti, bi: (bi, 0, ti)),
                # weight: constant index_map -> DMA'd once, stays resident
                pl.BlockSpec((1, C, 1), lambda ti, bi: (0, 0, 0)),
                # scalar bias in SMEM
                pl.BlockSpec(memory_space=pltpu.MemorySpace.SMEM),
            ],
            out_specs=pl.BlockSpec((Bb, tT), lambda ti, bi: (bi, ti)),
        ),
        compiler_params=pltpu.CompilerParams(
            # Both axes independent -> shard across v7x's 2 TensorCores.
            dimension_semantics=("parallel", "parallel"),
            vmem_limit_bytes=vmem_limit,
        ),
    )(mel, w3d, b1d)


if __name__ == "__main__":
    key = jax.random.PRNGKey(0)
    k_mel, k_w, k_b = jax.random.split(key, 3)

    C = N_MEL_CHANNELS
    # Deterministic parameter init mirroring nn.Conv1d defaults:
    # uniform(-1/sqrt(fan_in), 1/sqrt(fan_in)) with fan_in = C * kernel_size = C.
    bound = 1.0 / (C ** 0.5)
    weight = jax.random.uniform(k_w, (C,), minval=-bound, maxval=bound,
                                dtype=jnp.float32)
    bias = jax.random.uniform(k_b, (), minval=-bound, maxval=bound,
                              dtype=jnp.float32)

    def ref_forward(m):
        # Exact conv1x1 + squeeze semantics, f32 accumulation.
        return (jnp.sum(m.astype(jnp.float32) * weight[None, :, None], axis=1)
                + bias)

    # Case 1: small batch (B < 8), T a multiple of 128; single batch program
    # forces the time-axis split (grid (2, 1)) for megacore coverage.
    B1, T1 = 2, 384
    mel1 = jax.random.normal(k_mel, (B1, C, T1), dtype=jnp.float32)
    out1 = jax.block_until_ready(hifi_dummy_forward(mel1, weight, bias))
    assert out1.shape == (B1, T1)
    assert jnp.allclose(out1, ref_forward(mel1), atol=1e-5, rtol=1e-5)

    # Case 2: ragged shapes — B=9 (partial last batch block), T=200 (full-T tile,
    # not a multiple of 128) — exercises masked stores on both axes.
    B2, T2 = 9, 200
    mel2 = jax.random.normal(jax.random.fold_in(k_mel, 1), (B2, C, T2),
                             dtype=jnp.float32)
    out2 = jax.block_until_ready(hifi_dummy_forward(mel2, weight, bias))
    assert out2.shape == (B2, T2)
    assert jnp.allclose(out2, ref_forward(mel2), atol=1e-5, rtol=1e-5)

    # Case 3: bf16 input (half the HBM bytes), B=1 vocoder-style, odd T.
    B3, T3 = 1, 640
    mel3 = jax.random.normal(jax.random.fold_in(k_mel, 2), (B3, C, T3),
                             dtype=jnp.float32).astype(jnp.bfloat16)
    out3 = jax.block_until_ready(hifi_dummy_forward(mel3, weight, bias))
    assert out3.shape == (B3, T3)
    assert out3.dtype == jnp.bfloat16
    assert jnp.allclose(out3.astype(jnp.float32), ref_forward(mel3),
                        atol=2e-2, rtol=2e-2)

    print("KERNEL_OK")
</pallas_src>

<mosaic_0001>
module attributes {stable_mosaic.version = 11 : i64} {
  func.func @_conv1x1_kernel(%arg0: i32, %arg1: i32, %arg2: memref<2x80x256xf32, #tpu.memory_space<vmem>>, %arg3: memref<1x80x1xf32, #tpu.memory_space<vmem>>, %arg4: memref<1xf32, #tpu.memory_space<smem>>, %arg5: memref<2x256xf32, #tpu.memory_space<vmem>>) attributes {dimension_semantics = [#tpu.dimension_semantics<parallel>, #tpu.dimension_semantics<parallel>], iteration_bounds = array<i64: 2, 1>, scalar_prefetch = 0 : i64, scratch_operands = 0 : i64, tpu.core_type = #tpu.core_type<tc>, window_params = [{transform_indices = @transform_0, window_bounds = array<i64: 2, 80, 256>}, {pipeline_mode = #tpu.pipeline_mode<synchronous>, transform_indices = @transform_1, window_bounds = array<i64: 1, 80, 1>}, {transform_indices = @transform_2, window_bounds = array<i64: 1>}, {transform_indices = @transform_3, window_bounds = array<i64: 2, 256>}]} {
    %c0 = arith.constant 0 : index
    %c0_0 = arith.constant 0 : index
    %c0_1 = arith.constant 0 : index
    %0 = vector.load %arg3[%c0, %c0_0, %c0_1] : memref<1x80x1xf32, #tpu.memory_space<vmem>>, vector<1x80x1xf32>
    %cst = arith.constant 0.000000e+00 : f32
    %1 = vector.broadcast %cst : f32 to vector<2x256xf32>
    %c0_2 = arith.constant 0 : index
    %c0_3 = arith.constant 0 : index
    %c0_4 = arith.constant 0 : index
    %2 = vector.load %arg2[%c0_2, %c0_3, %c0_4] : memref<2x80x256xf32, #tpu.memory_space<vmem>>, vector<2x8x256xf32>
    %3 = vector.extract_strided_slice %0 {offsets = [0, 0, 0], sizes = [1, 8, 1], strides = [1, 1, 1]} : vector<1x80x1xf32> to vector<1x8x1xf32>
    %4 = vector.broadcast %3 : vector<1x8x1xf32> to vector<2x8x256xf32>
    %5 = arith.mulf %2, %4 : vector<2x8x256xf32>
    %cst_5 = arith.constant dense<0.000000e+00> : vector<2x256xf32>
    %6 = vector.multi_reduction <add>, %5, %cst_5 [1] : vector<2x8x256xf32> to vector<2x256xf32>
    %7 = arith.addf %1, %6 : vector<2x256xf32>
    %c0_6 = arith.constant 0 : index
    %c8 = arith.constant 8 : index
    %c0_7 = arith.constant 0 : index
    %8 = vector.load %arg2[%c0_6, %c8, %c0_7] : memref<2x80x256xf32, #tpu.memory_space<vmem>>, vector<2x8x256xf32>
    %9 = vector.extract_strided_slice %0 {offsets = [0, 8, 0], sizes = [1, 8, 1], strides = [1, 1, 1]} : vector<1x80x1xf32> to vector<1x8x1xf32>
    %10 = vector.broadcast %9 : vector<1x8x1xf32> to vector<2x8x256xf32>
    %11 = arith.mulf %8, %10 : vector<2x8x256xf32>
    %cst_8 = arith.constant dense<0.000000e+00> : vector<2x256xf32>
    %12 = vector.multi_reduction <add>, %11, %cst_8 [1] : vector<2x8x256xf32> to vector<2x256xf32>
    %13 = arith.addf %7, %12 : vector<2x256xf32>
    %c0_9 = arith.constant 0 : index
    %c16 = arith.constant 16 : index
    %c0_10 = arith.constant 0 : index
    %14 = vector.load %arg2[%c0_9, %c16, %c0_10] : memref<2x80x256xf32, #tpu.memory_space<vmem>>, vector<2x8x256xf32>
    %15 = vector.extract_strided_slice %0 {offsets = [0, 16, 0], sizes = [1, 8, 1], strides = [1, 1, 1]} : vector<1x80x1xf32> to vector<1x8x1xf32>
    %16 = vector.broadcast %15 : vector<1x8x1xf32> to vector<2x8x256xf32>
    %17 = arith.mulf %14, %16 : vector<2x8x256xf32>
    %cst_11 = arith.constant dense<0.000000e+00> : vector<2x256xf32>
    %18 = vector.multi_reduction <add>, %17, %cst_11 [1] : vector<2x8x256xf32> to vector<2x256xf32>
    %19 = arith.addf %13, %18 : vector<2x256xf32>
    %c0_12 = arith.constant 0 : index
    %c24 = arith.constant 24 : index
    %c0_13 = arith.constant 0 : index
    %20 = vector.load %arg2[%c0_12, %c24, %c0_13] : memref<2x80x256xf32, #tpu.memory_space<vmem>>, vector<2x8x256xf32>
    %21 = vector.extract_strided_slice %0 {offsets = [0, 24, 0], sizes = [1, 8, 1], strides = [1, 1, 1]} : vector<1x80x1xf32> to vector<1x8x1xf32>
    %22 = vector.broadcast %21 : vector<1x8x1xf32> to vector<2x8x256xf32>
    %23 = arith.mulf %20, %22 : vector<2x8x256xf32>
    %cst_14 = arith.constant dense<0.000000e+00> : vector<2x256xf32>
    %24 = vector.multi_reduction <add>, %23, %cst_14 [1] : vector<2x8x256xf32> to vector<2x256xf32>
    %25 = arith.addf %19, %24 : vector<2x256xf32>
    %c0_15 = arith.constant 0 : index
    %c32 = arith.constant 32 : index
    %c0_16 = arith.constant 0 : index
    %26 = vector.load %arg2[%c0_15, %c32, %c0_16] : memref<2x80x256xf32, #tpu.memory_space<vmem>>, vector<2x8x256xf32>
    %27 = vector.extract_strided_slice %0 {offsets = [0, 32, 0], sizes = [1, 8, 1], strides = [1, 1, 1]} : vector<1x80x1xf32> to vector<1x8x1xf32>
    %28 = vector.broadcast %27 : vector<1x8x1xf32> to vector<2x8x256xf32>
    %29 = arith.mulf %26, %28 : vector<2x8x256xf32>
    %cst_17 = arith.constant dense<0.000000e+00> : vector<2x256xf32>
    %30 = vector.multi_reduction <add>, %29, %cst_17 [1] : vector<2x8x256xf32> to vector<2x256xf32>
    %31 = arith.addf %25, %30 : vector<2x256xf32>
    %c0_18 = arith.constant 0 : index
    %c40 = arith.constant 40 : index
    %c0_19 = arith.constant 0 : index
    %32 = vector.load %arg2[%c0_18, %c40, %c0_19] : memref<2x80x256xf32, #tpu.memory_space<vmem>>, vector<2x8x256xf32>
    %33 = vector.extract_strided_slice %0 {offsets = [0, 40, 0], sizes = [1, 8, 1], strides = [1, 1, 1]} : vector<1x80x1xf32> to vector<1x8x1xf32>
    %34 = vector.broadcast %33 : vector<1x8x1xf32> to vector<2x8x256xf32>
    %35 = arith.mulf %32, %34 : vector<2x8x256xf32>
    %cst_20 = arith.constant dense<0.000000e+00> : vector<2x256xf32>
    %36 = vector.multi_reduction <add>, %35, %cst_20 [1] : vector<2x8x256xf32> to vector<2x256xf32>
    %37 = arith.addf %31, %36 : vector<2x256xf32>
    %c0_21 = arith.constant 0 : index
    %c48 = arith.constant 48 : index
    %c0_22 = arith.constant 0 : index
    %38 = vector.load %arg2[%c0_21, %c48, %c0_22] : memref<2x80x256xf32, #tpu.memory_space<vmem>>, vector<2x8x256xf32>
    %39 = vector.extract_strided_slice %0 {offsets = [0, 48, 0], sizes = [1, 8, 1], strides = [1, 1, 1]} : vector<1x80x1xf32> to vector<1x8x1xf32>
    %40 = vector.broadcast %39 : vector<1x8x1xf32> to vector<2x8x256xf32>
    %41 = arith.mulf %38, %40 : vector<2x8x256xf32>
    %cst_23 = arith.constant dense<0.000000e+00> : vector<2x256xf32>
    %42 = vector.multi_reduction <add>, %41, %cst_23 [1] : vector<2x8x256xf32> to vector<2x256xf32>
    %43 = arith.addf %37, %42 : vector<2x256xf32>
    %c0_24 = arith.constant 0 : index
    %c56 = arith.constant 56 : index
    %c0_25 = arith.constant 0 : index
    %44 = vector.load %arg2[%c0_24, %c56, %c0_25] : memref<2x80x256xf32, #tpu.memory_space<vmem>>, vector<2x8x256xf32>
    %45 = vector.extract_strided_slice %0 {offsets = [0, 56, 0], sizes = [1, 8, 1], strides = [1, 1, 1]} : vector<1x80x1xf32> to vector<1x8x1xf32>
    %46 = vector.broadcast %45 : vector<1x8x1xf32> to vector<2x8x256xf32>
    %47 = arith.mulf %44, %46 : vector<2x8x256xf32>
    %cst_26 = arith.constant dense<0.000000e+00> : vector<2x256xf32>
    %48 = vector.multi_reduction <add>, %47, %cst_26 [1] : vector<2x8x256xf32> to vector<2x256xf32>
    %49 = arith.addf %43, %48 : vector<2x256xf32>
    %c0_27 = arith.constant 0 : index
    %c64 = arith.constant 64 : index
    %c0_28 = arith.constant 0 : index
    %50 = vector.load %arg2[%c0_27, %c64, %c0_28] : memref<2x80x256xf32, #tpu.memory_space<vmem>>, vector<2x8x256xf32>
    %51 = vector.extract_strided_slice %0 {offsets = [0, 64, 0], sizes = [1, 8, 1], strides = [1, 1, 1]} : vector<1x80x1xf32> to vector<1x8x1xf32>
    %52 = vector.broadcast %51 : vector<1x8x1xf32> to vector<2x8x256xf32>
    %53 = arith.mulf %50, %52 : vector<2x8x256xf32>
    %cst_29 = arith.constant dense<0.000000e+00> : vector<2x256xf32>
    %54 = vector.multi_reduction <add>, %53, %cst_29 [1] : vector<2x8x256xf32> to vector<2x256xf32>
    %55 = arith.addf %49, %54 : vector<2x256xf32>
    %c0_30 = arith.constant 0 : index
    %c72 = arith.constant 72 : index
    %c0_31 = arith.constant 0 : index
    %56 = vector.load %arg2[%c0_30, %c72, %c0_31] : memref<2x80x256xf32, #tpu.memory_space<vmem>>, vector<2x8x256xf32>
    %57 = vector.extract_strided_slice %0 {offsets = [0, 72, 0], sizes = [1, 8, 1], strides = [1, 1, 1]} : vector<1x80x1xf32> to vector<1x8x1xf32>
    %58 = vector.broadcast %57 : vector<1x8x1xf32> to vector<2x8x256xf32>
    %59 = arith.mulf %56, %58 : vector<2x8x256xf32>
    %cst_32 = arith.constant dense<0.000000e+00> : vector<2x256xf32>
    %60 = vector.multi_reduction <add>, %59, %cst_32 [1] : vector<2x8x256xf32> to vector<2x256xf32>
    %61 = arith.addf %55, %60 : vector<2x256xf32>
    %c0_33 = arith.constant 0 : index
    %62 = memref.load %arg4[%c0_33] : memref<1xf32, #tpu.memory_space<smem>>
    %63 = vector.broadcast %62 : f32 to vector<2x256xf32>
    %64 = arith.addf %61, %63 : vector<2x256xf32>
    %c0_34 = arith.constant 0 : index
    %c0_35 = arith.constant 0 : index
    %65 = vector.load %arg5[%c0_34, %c0_35] : memref<2x256xf32, #tpu.memory_space<vmem>>, vector<2x256xf32>
    tpu.vector_store %arg5[%c0_34, %c0_35], %64 {strides = array<i32>} : memref<2x256xf32, #tpu.memory_space<vmem>>, vector<2x256xf32>,
    return
  }
  func.func @transform_0(%arg0: i32, %arg1: i32) -> (i32, i32, i32) {
    %c0_i32 = arith.constant 0 : i32
    %c0_i32_0 = arith.constant 0 : i32
    return %arg1, %c0_i32, %arg0 : i32, i32, i32
  }
  func.func @transform_1(%arg0: i32, %arg1: i32) -> (i32, i32, i32) {
    %c0_i32 = arith.constant 0 : i32
    %c0_i32_0 = arith.constant 0 : i32
    %c0_i32_1 = arith.constant 0 : i32
    %c0_i32_2 = arith.constant 0 : i32
    return %c0_i32, %c0_i32_0, %c0_i32_1 : i32, i32, i32
  }
  func.func @transform_2(%arg0: i32, %arg1: i32) -> i32 {
    %c0_i32 = arith.constant 0 : i32
    %c0_i32_0 = arith.constant 0 : i32
    return %c0_i32 : i32
  }
  func.func @transform_3(%arg0: i32, %arg1: i32) -> (i32, i32) {
    %c0_i32 = arith.constant 0 : i32
    return %arg1, %arg0 : i32, i32
  }
}

</mosaic_0001>

<llo_original>
// kernel: tpu_custom_call.1
$region0: #{tpu_custom_call.1}
  #allocation0 [shape = 'u32[]', space=smem, size = 0x4, offset = 0x4, fixed_abs, tag = 'smem constant byte address 0x4 - core index']
  #allocation1 [shape = 'u32[144,128]{1,0:T(1,128)}', space=vmem, size = 0x12000, scoped, tag = 'internal scratch']
  #allocation2 [shape = 'f32[1]{0:T(128)S(6)}', space=smem, size = 0x200, scoped, tag = 'scoped memory for tpu_custom_call.1']
  %s0 = inlined_call_operand.hbm [shape: f32[2,80,384], index: 0, kind: input, shape index: {}]
  %s1 = inlined_call_operand.vmem [shape: f32[1,80,1], index: 1, kind: input, shape index: {}]
  %s2 = inlined_call_operand.<no memory space> [shape: f32[1], index: 2, kind: input, shape index: {}]
  %s3 = inlined_call_operand.hbm [shape: f32[2,384], index: 3, kind: output, shape index: {}]
  %s4 = sld [smem:[#allocation0]]
  $region49: #{tpu_custom_call.1} parent=0
    _
  %s6 = ssub.s32 1, %s4
  %s7 = scalar_select 0, %s6, %s4
  %8 = sst [smem:[#allocation2]] %s2
  $region1: #{tpu_custom_call.1} parent=0
    #allocation3 [shape = 'u8[327680]{0}', space=vmem, size = 0x50000, scoped, tag = 'input window, operand 0']
    #allocation4 [shape = 's32[2]{0}', space=sflag, size = 0x8, scoped, tag = 'scoped memory for tpu_custom_call.1']
    #allocation5 [shape = 's32[2]{0}', space=sflag, size = 0x8, scoped, tag = 'scoped memory for tpu_custom_call.1']
    #allocation6 [shape = 'u8[4096]{0}', space=vmem, size = 0x1000, scoped, tag = 'output window, operand 0']
    %9 = vsyncpa [#allocation4], 0
    %s10 = scalar_lea.sflag [#allocation4], 1
    %11 = vsyncpa %s10, 0
    %12 = vsyncpa [#allocation5], 0
    %s13 = scalar_lea.sflag [#allocation5], 1
    %14 = vsyncpa %s13, 0
    loop: start=0, step=1, limit=4
    $region2: #{tpu_custom_call.1} parent=1 // loop_pre_header
      _
    $region3: #{tpu_custom_call.1} parent=1 // loop_header
      %s16 = sphi 0, %s20
      %p17 = scmp.ge.s32.totalorder %s16, 4
      %s23 = sphi 0, %s35
      %s24 = sphi 0, %s31
      %s25 = sphi 0, %s23
      %s26 = sphi 0, %s24
      %s27 = sphi 0, %s25
      %s28 = sphi 0, %s26
      %s40 = sphi 0, %s42
      %s43 = sphi 0, %s40
      %s44 = sphi 0, %s43
      %s60 = sphi 0, %s44
      %s64 = sphi 0, %s64
      %s66 = sphi 0, %s64
      %s67 = sphi 0, %s66
      %s81 = sphi 0, %s67
      %s85 = sphi 0, %s85
      %s87 = sphi 0, %s85
      %s88 = sphi 0, %s87
      %s102 = sphi 0, %s88
      %s110 = sphi 0, %s112
      %s113 = sphi 0, %s110
      %s114 = sphi 0, %s113
      %s130 = sphi 0, %s114
    $region4: #{tpu_custom_call.1} parent=1 // loop_header_branch
      %19 = sbr.rel (%p17) target = $region8
    $region5: #{tpu_custom_call.1} parent=1 // loop_body
      %s21 = ssub.s32 %s16, 1
      %s22 = ssub.s32 %s16, 2
      %s29 = sadd.s32 1, %s24
      %p30 = scmp.ge.s32.totalorder %s29, 1
      %s31 = scalar_select %p30, 0, %s29
      %s32 = sadd.s32 1, %s23
      %s33 = scalar_select %p30, %s32, %s23
      %p34 = scmp.ge.s32.totalorder %s33, 2
      %s35 = scalar_select %p34, 0, %s33
      %s36 = ssub.s32 %s24, %s31
      %s37 = ssub.s32 %s23, %s35
      %s38 = sor.u32 %s36, %s37
      %p39 = scmp.eq.s32.totalorder %s38, 0
      %s41 = sadd.s32 %s40, 1
      %s42 = scalar_select %p39, %s40, %s41
      %p45 = pneg %p39
      %p46 = scmp.eq.s32.totalorder %s16, 1
      %p47 = por %p45, %p46
      %p48 = scmp.ne.s32.totalorder %s40, %s43
      %p49 = scmp.eq.s32.totalorder %s16, 0
      %p50 = por %p48, %p49
      %p51 = scmp.ne.s32.totalorder %s40, %s43
      %p52 = scmp.eq.s32.totalorder %s21, 1
      %p53 = por %p51, %p52
      %p54 = scmp.ne.s32.totalorder %s43, %s44
      %p55 = scmp.eq.s32.totalorder %s21, 0
      %p56 = por %p54, %p55
      %p57 = scmp.ne.s32.totalorder %s43, %s44
      %p58 = scmp.eq.s32.totalorder %s22, 1
      %p59 = por %p57, %p58
      %p61 = scmp.ne.s32.totalorder %s44, %s60
      %p62 = scmp.eq.s32.totalorder %s22, 0
      %p63 = por %p61, %p62
      %s65 = sadd.s32 %s64, 1
      %p68 = scmp.eq.s32.totalorder %s16, 1
      %p69 = scmp.ne.s32.totalorder %s64, %s66
      %p70 = scmp.eq.s32.totalorder %s16, 0
      %p71 = por %p69, %p70
      %p72 = scmp.ne.s32.totalorder %s64, %s66
      %p73 = scmp.eq.s32.totalorder %s21, 1
      %p74 = por %p72, %p73
      %p75 = scmp.ne.s32.totalorder %s66, %s67
      %p76 = scmp.eq.s32.totalorder %s21, 0
      %p77 = por %p75, %p76
      %p78 = scmp.ne.s32.totalorder %s66, %s67
      %p79 = scmp.eq.s32.totalorder %s22, 1
      %p80 = por %p78, %p79
      %p82 = scmp.ne.s32.totalorder %s67, %s81
      %p83 = scmp.eq.s32.totalorder %s22, 0
      %p84 = por %p82, %p83
      %s86 = sadd.s32 %s85, 1
      %p89 = scmp.eq.s32.totalorder %s16, 1
      %p90 = scmp.ne.s32.totalorder %s85, %s87
      %p91 = scmp.eq.s32.totalorder %s16, 0
      %p92 = por %p90, %p91
      %p93 = scmp.ne.s32.totalorder %s85, %s87
      %p94 = scmp.eq.s32.totalorder %s21, 1
      %p95 = por %p93, %p94
      %p96 = scmp.ne.s32.totalorder %s87, %s88
      %p97 = scmp.eq.s32.totalorder %s21, 0
      %p98 = por %p96, %p97
      %p99 = scmp.ne.s32.totalorder %s87, %s88
      %p100 = scmp.eq.s32.totalorder %s22, 1
      %p101 = por %p99, %p100
      %p103 = scmp.ne.s32.totalorder %s88, %s102
      %p104 = scmp.eq.s32.totalorder %s22, 0
      %p105 = por %p103, %p104
      %s106 = ssub.s32 %s24, %s31
      %s107 = ssub.s32 %s23, %s35
      %s108 = sor.u32 %s106, %s107
      %p109 = scmp.eq.s32.totalorder %s108, 0
      %s111 = sadd.s32 %s110, 1
      %s112 = scalar_select %p109, %s110, %s111
      %p115 = pneg %p109
      %p116 = scmp.eq.s32.totalorder %s16, 1
      %p117 = por %p115, %p116
      %p118 = scmp.ne.s32.totalorder %s110, %s113
      %p119 = scmp.eq.s32.totalorder %s16, 0
      %p120 = por %p118, %p119
      %p121 = scmp.ne.s32.totalorder %s110, %s113
      %p122 = scmp.eq.s32.totalorder %s21, 1
      %p123 = por %p121, %p122
      %p124 = scmp.ne.s32.totalorder %s113, %s114
      %p125 = scmp.eq.s32.totalorder %s21, 0
      %p126 = por %p124, %p125
      %p127 = scmp.ne.s32.totalorder %s113, %s114
      %p128 = scmp.eq.s32.totalorder %s22, 1
      %p129 = por %p127, %p128
      %p131 = scmp.ne.s32.totalorder %s114, %s130
      %p132 = scmp.eq.s32.totalorder %s22, 0
      %p133 = por %p131, %p132
      %p134 = scmp.le.s32.totalorder 1, %s16
      %p135 = scmp.lt.s32.totalorder %s16, 3
      %p136 = pnand %p134, %p135
      %p137 = pneg %p136
      // Predicated region
      $region9: #{tpu_custom_call.1} parent=5 // pred_check
        _
      $region10: #{tpu_custom_call.1} parent=5 // pred_check_branch
        %139 = sbr.rel (%p136) target = $region12
      $region11: #{tpu_custom_call.1} parent=5 // pred_region
        %s140 = ssub.s32 %s16, 1
        // Predicated region
        $region13: #{tpu_custom_call.1} parent=11 // pred_check
          %p141 = pneg %p77
        $region14: #{tpu_custom_call.1} parent=11 // pred_check_branch
          %143 = sbr.rel (%p141) target = $region16
        $region15: #{tpu_custom_call.1} parent=11 // pred_region
          _
        $region16: #{tpu_custom_call.1} parent=11 // pred_fallthru
          _
        // Predicated region
        $region17: #{tpu_custom_call.1} parent=11 // pred_check
          %p144 = pneg %p98
        $region18: #{tpu_custom_call.1} parent=11 // pred_check_branch
          %146 = sbr.rel (%p144) target = $region20
        $region19: #{tpu_custom_call.1} parent=11 // pred_region
          _
        $region20: #{tpu_custom_call.1} parent=11 // pred_fallthru
          _
      $region12: #{tpu_custom_call.1} parent=5 // pred_fallthru
        _
      %p147 = scmp.lt.s32.totalorder %s16, 2
      // Predicated region
      $region21: #{tpu_custom_call.1} parent=5 // pred_check
        %p148 = pneg %p147
      $region22: #{tpu_custom_call.1} parent=5 // pred_check_branch
        %150 = sbr.rel (%p148) target = $region24
      $region23: #{tpu_custom_call.1} parent=5 // pred_region
        // Predicated region
        $region25: #{tpu_custom_call.1} parent=23 // pred_check
          %p151 = pneg %p50
        $region26: #{tpu_custom_call.1} parent=23 // pred_check_branch
          %153 = sbr.rel (%p151) target = $region28
        $region27: #{tpu_custom_call.1} parent=23 // pred_region
          %s154 = sand.u32 %s40, 1
          %s155 = scalar_lea.sflag [#allocation4], %s154
          %s156 = sand.u32 %s40, 1
          %s157 = smul.addr %s156, 320
          %s158 = scalar_lea.vmem [#allocation3], %s157
          %s159 = smul.u32 2, %s24
          %s160 = smul.u32 2, %s23
          %s161 = ssub.s32 3, %s160
          %p162 = scmp.lt.s32.totalorder %s161, 2
          %s163 = scalar_select %p162, %s161, 2
          %s164 = smul.u32 2560, %s163
          %s166 = ssub.s32 5120, %s164
          %167 = vsyncadd %s155, %s166
          %p168 = scmp.ne.s32.totalorder 0, %s164
          %s169 = smul.addr %s159, 30
          %s170 = sadd.s32 %s160, %s169
          %s171 = smul.addr %s170, 128
          %s172 = scalar_lea.hbm %s0, %s171
          %s173 = smul.u32 %s163, 8
          %s174 = smul.u32 %s173, 20
          %s175 = sshll.u32 %s158, 4
          %s176 = int_to_ptr.vmem [resolvable:$true] %s175
          %s177 = sshll.u32 %s174, 4
          %181 = dma.hbm_to_vmem [thread:$0]  (%p168), %s172, %s177, %s176, %s155, 384, 256, %s173
        $region28: #{tpu_custom_call.1} parent=23 // pred_fallthru
          _
      $region24: #{tpu_custom_call.1} parent=5 // pred_fallthru
        _
      %p182 = scmp.le.s32.totalorder 1, %s16
      %p183 = scmp.lt.s32.totalorder %s16, 3
      %p184 = pnand %p182, %p183
      %p185 = pneg %p184
      // Predicated region
      $region29: #{tpu_custom_call.1} parent=5 // pred_check
        _
      $region30: #{tpu_custom_call.1} parent=5 // pred_check_branch
        %187 = sbr.rel (%p184) target = $region32
      $region31: #{tpu_custom_call.1} parent=5 // pred_region
        %s188 = ssub.s32 %s16, 1
        %s189 = sand.u32 %s43, 1
        %s190 = scalar_lea.sflag [#allocation4], %s189
        %s191 = sand.u32 %s43, 1
        %s192 = smul.addr %s191, 320
        %s193 = scalar_lea.vmem [#allocation3], %s192
        // Predicated region
        $region33: #{tpu_custom_call.1} parent=31 // pred_check
          %p194 = pneg %p56
        $region34: #{tpu_custom_call.1} parent=31 // pred_check_branch
          %196 = sbr.rel (%p194) target = $region36
        $region35: #{tpu_custom_call.1} parent=31 // pred_region
          %197 = dma.done %s190, 5120
        $region36: #{tpu_custom_call.1} parent=31 // pred_fallthru
          _
        %s198 = sand.u32 %s43, 1
        %s199 = scalar_lea.sflag [#allocation4], %s198
        %s200 = sand.u32 %s43, 1
        %s201 = smul.addr %s200, 320
        %s202 = scalar_lea.vmem [#allocation3], %s201
        %p203 = pneg %p56
        %p204 = pneg %p53
        %p205 = pneg %p77
        %p206 = pneg %p74
        %p207 = pneg %p98
        %p208 = pneg %p95
        %p209 = pneg %p126
        %p210 = pneg %p123
        %s211 = sand.u32 %s113, 1
        %s212 = scalar_lea.sflag [#allocation5], %s211
        %s213 = sand.u32 %s113, 1
        %s214 = smul.addr %s213, 4
        %s215 = scalar_lea.vmem [#allocation6], %s214
        %s216 = smul.u32 2, %s26
        %s217 = smul.u32 2, %s25
        %s218 = ssub.s32 3, %s217
        %p219 = scmp.lt.s32.totalorder %s218, 2
        %s220 = scalar_select %p219, %s218, 2
        %s221 = smul.u32 2560, %s220
        %s222 = smul.u32 2, %s25
        %s223 = ssub.s32 3, %s222
        %p224 = scmp.lt.s32.totalorder %s223, 2
        %s225 = scalar_select %p224, %s223, 2
        %s226 = smul.u32 32, %s225
        %v227 = vld [vmem:[%s1] sm:$0xff]
        %v228 = vld [vmem:[%s1 + $0x8] sm:$0xff]
        %v229 = vld [vmem:[%s1 + $0x10] sm:$0xff]
        %v230 = vld [vmem:[%s1 + $0x18] sm:$0xff]
        %v231 = vld [vmem:[%s1 + $0x20] sm:$0xff]
        %v232 = vld [vmem:[%s1 + $0x28] sm:$0xff]
        %v233 = vld [vmem:[%s1 + $0x30] sm:$0xff]
        %v234 = vld [vmem:[%s1 + $0x38] sm:$0xff]
        %v235 = vld [vmem:[%s1 + $0x40] sm:$0xff]
        %v236 = vld [vmem:[%s1 + $0x48] sm:$0xff]
        %v237 = vld [vmem:[%s193] sm:$0xff]
        %v238 = vld [vmem:[%s193 + $0x8] sm:$0xff]
        %v239 = vld [vmem:[%s193 + $0xa0] sm:$0xff]
        %v240 = vld [vmem:[%s193 + $0xa8] sm:$0xff]
        %242 = vset.pattern.permute.xlu0 0
        %243 = vperm.xlu0 %242, %v227
        %v244 = vpop.permute.xlu0 %243
        %v246 = vmul.f32 %v237, %v244
        %v247 = vmul.f32 %v238, %v244
        %v248 = vmul.f32 %v239, %v244
        %v249 = vmul.f32 %v240, %v244
        %v250 = vrot.slane %v246, 4
        %v251 = vadd.f32 %v246, %v250
        %v252 = vrot.slane %v251, 2
        %v253 = vadd.f32 %v251, %v252
        %v254 = vrot.slane %v253, 1
        %v255 = vadd.f32 %v253, %v254
        %v256 = vrot.slane %v247, 4
        %v257 = vadd.f32 %v247, %v256
        %v258 = vrot.slane %v257, 2
        %v259 = vadd.f32 %v257, %v258
        %v260 = vrot.slane %v259, 1
        %v261 = vadd.f32 %v259, %v260
        %v262 = vrot.slane %v248, 4
        %v263 = vadd.f32 %v248, %v262
        %v264 = vrot.slane %v263, 2
        %v265 = vadd.f32 %v263, %v264
        %v266 = vrot.slane %v265, 1
        %v267 = vadd.f32 %v265, %v266
        %v268 = vrot.slane %v249, 4
        %v269 = vadd.f32 %v249, %v268
        %v270 = vrot.slane %v269, 2
        %v271 = vadd.f32 %v269, %v270
        %v272 = vrot.slane %v271, 1
        %v273 = vadd.f32 %v271, %v272
        %v274 = vadd.f32 %v255, 0.0
        %v275 = vadd.f32 %v261, 0.0
        %v276 = vadd.f32 %v267, 0.0
        %v277 = vadd.f32 %v273, 0.0
        %v278 = vld [vmem:[%s193 + $0x10] sm:$0xff]
        %v279 = vld [vmem:[%s193 + $0x18] sm:$0xff]
        %v280 = vld [vmem:[%s193 + $0xb0] sm:$0xff]
        %v281 = vld [vmem:[%s193 + $0xb8] sm:$0xff]
        %283 = vset.pattern.permute.xlu0 0
        %284 = vperm.xlu0 %283, %v228
        %v285 = vpop.permute.xlu0 %284
        %v287 = vmul.f32 %v278, %v285
        %v288 = vmul.f32 %v279, %v285
        %v289 = vmul.f32 %v280, %v285
        %v290 = vmul.f32 %v281, %v285
        %v291 = vrot.slane %v287, 4
        %v292 = vadd.f32 %v287, %v291
        %v293 = vrot.slane %v292, 2
        %v294 = vadd.f32 %v292, %v293
        %v295 = vrot.slane %v294, 1
        %v296 = vadd.f32 %v294, %v295
        %v297 = vrot.slane %v288, 4
        %v298 = vadd.f32 %v288, %v297
        %v299 = vrot.slane %v298, 2
        %v300 = vadd.f32 %v298, %v299
        %v301 = vrot.slane %v300, 1
        %v302 = vadd.f32 %v300, %v301
        %v303 = vrot.slane %v289, 4
        %v304 = vadd.f32 %v289, %v303
        %v305 = vrot.slane %v304, 2
        %v306 = vadd.f32 %v304, %v305
        %v307 = vrot.slane %v306, 1
        %v308 = vadd.f32 %v306, %v307
        %v309 = vrot.slane %v290, 4
        %v310 = vadd.f32 %v290, %v309
        %v311 = vrot.slane %v310, 2
        %v312 = vadd.f32 %v310, %v311
        %v313 = vrot.slane %v312, 1
        %v314 = vadd.f32 %v312, %v313
        %v315 = vadd.f32 %v274, %v296
        %v316 = vadd.f32 %v275, %v302
        %v317 = vadd.f32 %v276, %v308
        %v318 = vadd.f32 %v277, %v314
        %v319 = vld [vmem:[%s193 + $0x20] sm:$0xff]
        %v320 = vld [vmem:[%s193 + $0x28] sm:$0xff]
        %v321 = vld [vmem:[%s193 + $0xc0] sm:$0xff]
        %v322 = vld [vmem:[%s193 + $0xc8] sm:$0xff]
        %324 = vset.pattern.permute.xlu0 0
        %325 = vperm.xlu0 %324, %v229
        %v326 = vpop.permute.xlu0 %325
        %v328 = vmul.f32 %v319, %v326
        %v329 = vmul.f32 %v320, %v326
        %v330 = vmul.f32 %v321, %v326
        %v331 = vmul.f32 %v322, %v326
        %v332 = vrot.slane %v328, 4
        %v333 = vadd.f32 %v328, %v332
        %v334 = vrot.slane %v333, 2
        %v335 = vadd.f32 %v333, %v334
        %v336 = vrot.slane %v335, 1
        %v337 = vadd.f32 %v335, %v336
        %v338 = vrot.slane %v329, 4
        %v339 = vadd.f32 %v329, %v338
        %v340 = vrot.slane %v339, 2
        %v341 = vadd.f32 %v339, %v340
        %v342 = vrot.slane %v341, 1
        %v343 = vadd.f32 %v341, %v342
        %v344 = vrot.slane %v330, 4
        %v345 = vadd.f32 %v330, %v344
        %v346 = vrot.slane %v345, 2
        %v347 = vadd.f32 %v345, %v346
        %v348 = vrot.slane %v347, 1
        %v349 = vadd.f32 %v347, %v348
        %v350 = vrot.slane %v331, 4
        %v351 = vadd.f32 %v331, %v350
        %v352 = vrot.slane %v351, 2
        %v353 = vadd.f32 %v351, %v352
        %v354 = vrot.slane %v353, 1
        %v355 = vadd.f32 %v353, %v354
        %v356 = vadd.f32 %v315, %v337
        %v357 = vadd.f32 %v316, %v343
        %v358 = vadd.f32 %v317, %v349
        %v359 = vadd.f32 %v318, %v355
        %v360 = vld [vmem:[%s193 + $0x30] sm:$0xff]
        %v361 = vld [vmem:[%s193 + $0x38] sm:$0xff]
        %v362 = vld [vmem:[%s193 + $0xd0] sm:$0xff]
        %v363 = vld [vmem:[%s193 + $0xd8] sm:$0xff]
        %365 = vset.pattern.permute.xlu0 0
        %366 = vperm.xlu0 %365, %v230
        %v367 = vpop.permute.xlu0 %366
        %v369 = vmul.f32 %v360, %v367
        %v370 = vmul.f32 %v361, %v367
        %v371 = vmul.f32 %v362, %v367
        %v372 = vmul.f32 %v363, %v367
        %v373 = vrot.slane %v369, 4
        %v374 = vadd.f32 %v369, %v373
        %v375 = vrot.slane %v374, 2
        %v376 = vadd.f32 %v374, %v375
        %v377 = vrot.slane %v376, 1
        %v378 = vadd.f32 %v376, %v377
        %v379 = vrot.slane %v370, 4
        %v380 = vadd.f32 %v370, %v379
        %v381 = vrot.slane %v380, 2
        %v382 = vadd.f32 %v380, %v381
        %v383 = vrot.slane %v382, 1
        %v384 = vadd.f32 %v382, %v383
        %v385 = vrot.slane %v371, 4
        %v386 = vadd.f32 %v371, %v385
        %v387 = vrot.slane %v386, 2
        %v388 = vadd.f32 %v386, %v387
        %v389 = vrot.slane %v388, 1
        %v390 = vadd.f32 %v388, %v389
        %v391 = vrot.slane %v372, 4
        %v392 = vadd.f32 %v372, %v391
        %v393 = vrot.slane %v392, 2
        %v394 = vadd.f32 %v392, %v393
        %v395 = vrot.slane %v394, 1
        %v396 = vadd.f32 %v394, %v395
        %v397 = vadd.f32 %v356, %v378
        %v398 = vadd.f32 %v357, %v384
        %v399 = vadd.f32 %v358, %v390
        %v400 = vadd.f32 %v359, %v396
        %v401 = vld [vmem:[%s193 + $0x40] sm:$0xff]
        %v402 = vld [vmem:[%s193 + $0x48] sm:$0xff]
        %v403 = vld [vmem:[%s193 + $0xe0] sm:$0xff]
        %v404 = vld [vmem:[%s193 + $0xe8] sm:$0xff]
        %406 = vset.pattern.permute.xlu0 0
        %407 = vperm.xlu0 %406, %v231
        %v408 = vpop.permute.xlu0 %407
        %v410 = vmul.f32 %v401, %v408
        %v411 = vmul.f32 %v402, %v408
        %v412 = vmul.f32 %v403, %v408
        %v413 = vmul.f32 %v404, %v408
        %v414 = vrot.slane %v410, 4
        %v415 = vadd.f32 %v410, %v414
        %v416 = vrot.slane %v415, 2
        %v417 = vadd.f32 %v415, %v416
        %v418 = vrot.slane %v417, 1
        %v419 = vadd.f32 %v417, %v418
        %v420 = vrot.slane %v411, 4
        %v421 = vadd.f32 %v411, %v420
        %v422 = vrot.slane %v421, 2
        %v423 = vadd.f32 %v421, %v422
        %v424 = vrot.slane %v423, 1
        %v425 = vadd.f32 %v423, %v424
        %v426 = vrot.slane %v412, 4
        %v427 = vadd.f32 %v412, %v426
        %v428 = vrot.slane %v427, 2
        %v429 = vadd.f32 %v427, %v428
        %v430 = vrot.slane %v429, 1
        %v431 = vadd.f32 %v429, %v430
        %v432 = vrot.slane %v413, 4
        %v433 = vadd.f32 %v413, %v432
        %v434 = vrot.slane %v433, 2
        %v435 = vadd.f32 %v433, %v434
        %v436 = vrot.slane %v435, 1
        %v437 = vadd.f32 %v435, %v436
        %v438 = vadd.f32 %v397, %v419
        %v439 = vadd.f32 %v398, %v425
        %v440 = vadd.f32 %v399, %v431
        %v441 = vadd.f32 %v400, %v437
        %v442 = vld [vmem:[%s193 + $0x50] sm:$0xff]
        %v443 = vld [vmem:[%s193 + $0x58] sm:$0xff]
        %v444 = vld [vmem:[%s193 + $0xf0] sm:$0xff]
        %v445 = vld [vmem:[%s193 + $0xf8] sm:$0xff]
        %447 = vset.pattern.permute.xlu0 0
        %448 = vperm.xlu0 %447, %v232
        %v449 = vpop.permute.xlu0 %448
        %v451 = vmul.f32 %v442, %v449
        %v452 = vmul.f32 %v443, %v449
        %v453 = vmul.f32 %v444, %v449
        %v454 = vmul.f32 %v445, %v449
        %v455 = vrot.slane %v451, 4
        %v456 = vadd.f32 %v451, %v455
        %v457 = vrot.slane %v456, 2
        %v458 = vadd.f32 %v456, %v457
        %v459 = vrot.slane %v458, 1
        %v460 = vadd.f32 %v458, %v459
        %v461 = vrot.slane %v452, 4
        %v462 = vadd.f32 %v452, %v461
        %v463 = vrot.slane %v462, 2
        %v464 = vadd.f32 %v462, %v463
        %v465 = vrot.slane %v464, 1
        %v466 = vadd.f32 %v464, %v465
        %v467 = vrot.slane %v453, 4
        %v468 = vadd.f32 %v453, %v467
        %v469 = vrot.slane %v468, 2
        %v470 = vadd.f32 %v468, %v469
        %v471 = vrot.slane %v470, 1
        %v472 = vadd.f32 %v470, %v471
        %v473 = vrot.slane %v454, 4
        %v474 = vadd.f32 %v454, %v473
        %v475 = vrot.slane %v474, 2
        %v476 = vadd.f32 %v474, %v475
        %v477 = vrot.slane %v476, 1
        %v478 = vadd.f32 %v476, %v477
        %v479 = vadd.f32 %v438, %v460
        %v480 = vadd.f32 %v439, %v466
        %v481 = vadd.f32 %v440, %v472
        %v482 = vadd.f32 %v441, %v478
        %v483 = vld [vmem:[%s193 + $0x60] sm:$0xff]
        %v484 = vld [vmem:[%s193 + $0x68] sm:$0xff]
        %v485 = vld [vmem:[%s193 + $0x100] sm:$0xff]
        %v486 = vld [vmem:[%s193 + $0x108] sm:$0xff]
        %488 = vset.pattern.permute.xlu0 0
        %489 = vperm.xlu0 %488, %v233
        %v490 = vpop.permute.xlu0 %489
        %v492 = vmul.f32 %v483, %v490
        %v493 = vmul.f32 %v484, %v490
        %v494 = vmul.f32 %v485, %v490
        %v495 = vmul.f32 %v486, %v490
        %v496 = vrot.slane %v492, 4
        %v497 = vadd.f32 %v492, %v496
        %v498 = vrot.slane %v497, 2
        %v499 = vadd.f32 %v497, %v498
        %v500 = vrot.slane %v499, 1
        %v501 = vadd.f32 %v499, %v500
        %v502 = vrot.slane %v493, 4
        %v503 = vadd.f32 %v493, %v502
        %v504 = vrot.slane %v503, 2
        %v505 = vadd.f32 %v503, %v504
        %v506 = vrot.slane %v505, 1
        %v507 = vadd.f32 %v505, %v506
        %v508 = vrot.slane %v494, 4
        %v509 = vadd.f32 %v494, %v508
        %v510 = vrot.slane %v509, 2
        %v511 = vadd.f32 %v509, %v510
        %v512 = vrot.slane %v511, 1
        %v513 = vadd.f32 %v511, %v512
        %v514 = vrot.slane %v495, 4
        %v515 = vadd.f32 %v495, %v514
        %v516 = vrot.slane %v515, 2
        %v517 = vadd.f32 %v515, %v516
        %v518 = vrot.slane %v517, 1
        %v519 = vadd.f32 %v517, %v518
        %v520 = vadd.f32 %v479, %v501
        %v521 = vadd.f32 %v480, %v507
        %v522 = vadd.f32 %v481, %v513
        %v523 = vadd.f32 %v482, %v519
        %v524 = vld [vmem:[%s193 + $0x70] sm:$0xff]
        %v525 = vld [vmem:[%s193 + $0x78] sm:$0xff]
        %v526 = vld [vmem:[%s193 + $0x110] sm:$0xff]
        %v527 = vld [vmem:[%s193 + $0x118] sm:$0xff]
        %529 = vset.pattern.permute.xlu0 0
        %530 = vperm.xlu0 %529, %v234
        %v531 = vpop.permute.xlu0 %530
        %v533 = vmul.f32 %v524, %v531
        %v534 = vmul.f32 %v525, %v531
        %v535 = vmul.f32 %v526, %v531
        %v536 = vmul.f32 %v527, %v531
        %v537 = vrot.slane %v533, 4
        %v538 = vadd.f32 %v533, %v537
        %v539 = vrot.slane %v538, 2
        %v540 = vadd.f32 %v538, %v539
        %v541 = vrot.slane %v540, 1
        %v542 = vadd.f32 %v540, %v541
        %v543 = vrot.slane %v534, 4
        %v544 = vadd.f32 %v534, %v543
        %v545 = vrot.slane %v544, 2
        %v546 = vadd.f32 %v544, %v545
        %v547 = vrot.slane %v546, 1
        %v548 = vadd.f32 %v546, %v547
        %v549 = vrot.slane %v535, 4
        %v550 = vadd.f32 %v535, %v549
        %v551 = vrot.slane %v550, 2
        %v552 = vadd.f32 %v550, %v551
        %v553 = vrot.slane %v552, 1
        %v554 = vadd.f32 %v552, %v553
        %v555 = vrot.slane %v536, 4
        %v556 = vadd.f32 %v536, %v555
        %v557 = vrot.slane %v556, 2
        %v558 = vadd.f32 %v556, %v557
        %v559 = vrot.slane %v558, 1
        %v560 = vadd.f32 %v558, %v559
        %v561 = vadd.f32 %v520, %v542
        %v562 = vadd.f32 %v521, %v548
        %v563 = vadd.f32 %v522, %v554
        %v564 = vadd.f32 %v523, %v560
        %v565 = vld [vmem:[%s193 + $0x80] sm:$0xff]
        %v566 = vld [vmem:[%s193 + $0x88] sm:$0xff]
        %v567 = vld [vmem:[%s193 + $0x120] sm:$0xff]
        %v568 = vld [vmem:[%s193 + $0x128] sm:$0xff]
        %570 = vset.pattern.permute.xlu0 0
        %571 = vperm.xlu0 %570, %v235
        %v572 = vpop.permute.xlu0 %571
        %v574 = vmul.f32 %v565, %v572
        %v575 = vmul.f32 %v566, %v572
        %v576 = vmul.f32 %v567, %v572
        %v577 = vmul.f32 %v568, %v572
        %v578 = vrot.slane %v574, 4
        %v579 = vadd.f32 %v574, %v578
        %v580 = vrot.slane %v579, 2
        %v581 = vadd.f32 %v579, %v580
        %v582 = vrot.slane %v581, 1
        %v583 = vadd.f32 %v581, %v582
        %v584 = vrot.slane %v575, 4
        %v585 = vadd.f32 %v575, %v584
        %v586 = vrot.slane %v585, 2
        %v587 = vadd.f32 %v585, %v586
        %v588 = vrot.slane %v587, 1
        %v589 = vadd.f32 %v587, %v588
        %v590 = vrot.slane %v576, 4
        %v591 = vadd.f32 %v576, %v590
        %v592 = vrot.slane %v591, 2
        %v593 = vadd.f32 %v591, %v592
        %v594 = vrot.slane %v593, 1
        %v595 = vadd.f32 %v593, %v594
        %v596 = vrot.slane %v577, 4
        %v597 = vadd.f32 %v577, %v596
        %v598 = vrot.slane %v597, 2
        %v599 = vadd.f32 %v597, %v598
        %v600 = vrot.slane %v599, 1
        %v601 = vadd.f32 %v599, %v600
        %v602 = vadd.f32 %v561, %v583
        %v603 = vadd.f32 %v562, %v589
        %v604 = vadd.f32 %v563, %v595
        %v605 = vadd.f32 %v564, %v601
        %v606 = vld [vmem:[%s193 + $0x90] sm:$0xff]
        %v607 = vld [vmem:[%s193 + $0x98] sm:$0xff]
        %v608 = vld [vmem:[%s193 + $0x130] sm:$0xff]
        %v609 = vld [vmem:[%s193 + $0x138] sm:$0xff]
        %611 = vset.pattern.permute.xlu0 0
        %612 = vperm.xlu0 %611, %v236
        %v613 = vpop.permute.xlu0 %612
        %v615 = vmul.f32 %v606, %v613
        %v616 = vmul.f32 %v607, %v613
        %v617 = vmul.f32 %v608, %v613
        %v618 = vmul.f32 %v609, %v613
        %v619 = vrot.slane %v615, 4
        %v620 = vadd.f32 %v615, %v619
        %v621 = vrot.slane %v620, 2
        %v622 = vadd.f32 %v620, %v621
        %v623 = vrot.slane %v622, 1
        %v624 = vadd.f32 %v622, %v623
        %v625 = vrot.slane %v616, 4
        %v626 = vadd.f32 %v616, %v625
        %v627 = vrot.slane %v626, 2
        %v628 = vadd.f32 %v626, %v627
        %v629 = vrot.slane %v628, 1
        %v630 = vadd.f32 %v628, %v629
        %v631 = vrot.slane %v617, 4
        %v632 = vadd.f32 %v617, %v631
        %v633 = vrot.slane %v632, 2
        %v634 = vadd.f32 %v632, %v633
        %v635 = vrot.slane %v634, 1
        %v636 = vadd.f32 %v634, %v635
        %v637 = vrot.slane %v618, 4
        %v638 = vadd.f32 %v618, %v637
        %v639 = vrot.slane %v638, 2
        %v640 = vadd.f32 %v638, %v639
        %v641 = vrot.slane %v640, 1
        %v642 = vadd.f32 %v640, %v641
        %v643 = vadd.f32 %v602, %v624
        %v644 = vadd.f32 %v603, %v630
        %v645 = vadd.f32 %v604, %v636
        %v646 = vadd.f32 %v605, %v642
        %s647 = sld [smem:[#allocation2]]
        %v648 = vstv %s647
        %v649 = vadd.f32 %v643, %v648
        %v650 = vadd.f32 %v644, %v648
        %v651 = vadd.f32 %v645, %v648
        %v652 = vadd.f32 %v646, %v648
        %v657 = vcombine.low %v649, %v650
        %v659 = vunpack.c.l.s4 1983009808
        %v660 = vunpack.c.0.s8 %v659
        %v661 = vlaneseq
        %v662 = vshrl.u32 %v661, 7
        %v663 = vsub.s32 %v660, %v662
        %v664 = vrot.slane %v657, %v663
        %v665 = vcombine.low %v651, %v652
        %v667 = vunpack.c.l.s4 1983009808
        %v668 = vunpack.c.0.s8 %v667
        %v669 = vlaneseq
        %v670 = vshrl.u32 %v669, 7
        %v671 = vsub.s32 %v668, %v670
        %v672 = vrot.slane %v665, %v671
        %vm673 = vcmask 1044484
        %v674 = vsel %vm673, %v664, %v664
        %vm675 = vcmask 1046534
        %v676 = vsel %vm675, %v664, %v674
        %v677 = vrot.slane %v672, 7
        %vm678 = vcmask 1041409
        %v679 = vsel %vm678, %v677, %v676
        %vm680 = vcmask 1043459
        %v681 = vsel %vm680, %v677, %v679
        %vm682 = vcmask 1045509
        %v683 = vsel %vm682, %v677, %v681
        %vm684 = vcmask 1047559
        %v685 = vsel %vm684, %v677, %v683
        %687 = vst [vmem:[%s215] sm:$0xf] %v685
        %s688 = sand.u32 %s113, 1
        %s689 = scalar_lea.sflag [#allocation5], %s688
        %s690 = sand.u32 %s113, 1
        %s691 = smul.addr %s690, 4
        %s692 = scalar_lea.vmem [#allocation6], %s691
        // Predicated region
        $region37: #{tpu_custom_call.1} parent=31 // pred_check
          %p693 = pneg %p123
        $region38: #{tpu_custom_call.1} parent=31 // pred_check_branch
          %695 = sbr.rel (%p693) target = $region40
        $region39: #{tpu_custom_call.1} parent=31 // pred_region
          %s696 = smul.u32 2, %s25
          %s697 = ssub.s32 3, %s696
          %p698 = scmp.lt.s32.totalorder %s697, 2
          %s699 = scalar_select %p698, %s697, 2
          %s700 = smul.u32 32, %s699
          %s702 = ssub.s32 64, %s700
          %703 = vsyncadd %s689, %s702
          %p704 = scmp.ne.s32.totalorder 0, %s700
          %s705 = smul.addr %s26, 3
          %s706 = sadd.s32 %s696, %s705
          %s707 = smul.addr %s706, 32
          %s708 = scalar_lea.hbm %s3, %s707
          %s709 = smul.u32 %s699, 2
          %s710 = sshll.u32 %s709, 4
          %s711 = sshll.u32 %s692, 4
          %s712 = int_to_ptr.vmem [resolvable:$true] %s711
          %714 = dma.vmem_to_hbm [thread:$0]  (%p704), %s712, %s710, %s708, %s689
        $region40: #{tpu_custom_call.1} parent=31 // pred_fallthru
          _
      $region32: #{tpu_custom_call.1} parent=5 // pred_fallthru
        _
      %p715 = scmp.le.s32.totalorder 2, %s16
      // Predicated region
      $region41: #{tpu_custom_call.1} parent=5 // pred_check
        %p716 = pneg %p715
      $region42: #{tpu_custom_call.1} parent=5 // pred_check_branch
        %718 = sbr.rel (%p716) target = $region44
      $region43: #{tpu_custom_call.1} parent=5 // pred_region
        %s719 = ssub.s32 %s16, 2
        // Predicated region
        $region45: #{tpu_custom_call.1} parent=43 // pred_check
          %p720 = pneg %p129
        $region46: #{tpu_custom_call.1} parent=43 // pred_check_branch
          %722 = sbr.rel (%p720) target = $region48
        $region47: #{tpu_custom_call.1} parent=43 // pred_region
          %s723 = sand.u32 %s114, 1
          %s724 = scalar_lea.sflag [#allocation5], %s723
          %s725 = sand.u32 %s114, 1
          %s726 = smul.addr %s725, 4
          %s727 = scalar_lea.vmem [#allocation6], %s726
          %728 = dma.done %s724, 64
        $region48: #{tpu_custom_call.1} parent=43 // pred_fallthru
          _
      $region44: #{tpu_custom_call.1} parent=5 // pred_fallthru
        _
    $region6: #{tpu_custom_call.1} parent=1 // loop_footer
      %s20 = sadd.s32 1, %s16
    $region7: #{tpu_custom_call.1} parent=1 // loop_footer_branch
      %15 = sbr.rel target = $region3
    $region8: #{tpu_custom_call.1} parent=1 // loop_exit
      _
    %729 = vsyncpa [#allocation4], 1
    %s730 = scalar_lea.sflag [#allocation4], 1
    %731 = vsyncpa %s730, 1
    %732 = vsyncpa [#allocation5], 1
    %s733 = scalar_lea.sflag [#allocation5], 1
    %734 = vsyncpa %s733, 1

</llo_original>
